<compile_context>
chip_gen: v7x
topology: tpu7x:2x2x1
jax: 0.10.0
libtpu: 0.0.40
codegen_flags: <defaults>
</compile_context>

<pallas_src>
import numpy as np
import jax
import jax.numpy as jnp
from jax.experimental import pallas as pl
from jax.experimental.pallas import tpu as pltpu


def _dp_passthrough_kernel(lb_ref, ub_ref, lb_out_ref, ub_out_ref, ok_ref):
    # lb/ub outputs alias the inputs (see input_output_aliases) and live in
    # memory_space=pl.ANY (HBM), so there is nothing to move: no HBM<->VMEM
    # DMA, no grid steps.  Only a tiny SMEM flag is written so the kernel has
    # an observable effect we can assert on.
    del lb_ref, ub_ref, lb_out_ref, ub_out_ref
    ok_ref[0] = jnp.int32(1)


def dp_print_layer(lb, ub, *, in_features, verbose=False):
    """JAX/Pallas equivalent of DPPrintLayer.forward.

    Prints the lower/upper bounds (full tensors when ``verbose=True``, a cheap
    shape/min/max summary otherwise) and returns the bounds unchanged via a
    zero-DMA, input-aliased Pallas pass-through.

    Note: because the outputs alias the inputs, callers must not read the
    original ``lb``/``ub`` arrays after this call (and, under jit, should
    donate them via ``donate_argnums`` so the aliasing actually takes effect).
    """
    assert lb.shape == ub.shape and lb.dtype == ub.dtype
    assert lb.shape[-1] == in_features

    # --- prints (ordered to match PyTorch's sequential print order) ---------
    jax.debug.print('--- DPPrintLayer', ordered=True)
    if verbose:
        # Full-tensor prints, matching the reference module exactly.
        jax.debug.print('lower bounds:  {}', lb, ordered=True)
        jax.debug.print('upper bounds:  {}', ub, ordered=True)
    else:
        # Cheap summary: avoids shipping the whole tensors to the host.
        shp = str(tuple(int(d) for d in lb.shape))
        jax.debug.print('lower bounds:  shape=' + shp + ' min={} max={}',
                        jnp.min(lb), jnp.max(lb), ordered=True)
        jax.debug.print('upper bounds:  shape=' + shp + ' min={} max={}',
                        jnp.min(ub), jnp.max(ub), ordered=True)

    # --- zero-DMA identity pass-through --------------------------------------
    any_spec = pl.BlockSpec(memory_space=pl.ANY)
    out_shape = (
        jax.ShapeDtypeStruct(lb.shape, lb.dtype),
        jax.ShapeDtypeStruct(ub.shape, ub.dtype),
        jax.ShapeDtypeStruct((1,), jnp.int32),          # "kernel ran" flag
    )

    lb_out, ub_out, _ok = pl.pallas_call(
        _dp_passthrough_kernel,
        out_shape=out_shape,
        in_specs=[any_spec, any_spec],
        out_specs=(
            any_spec,
            any_spec,
            pl.BlockSpec(memory_space=pltpu.MemorySpace.SMEM),
        ),
        # Outputs are literally the input buffers: no fresh HBM allocation and
        # no copy of the bound data.
        input_output_aliases={0: 0, 1: 1},
    )(lb, ub)
    return lb_out, ub_out


if __name__ == "__main__":
    key = jax.random.PRNGKey(0)
    # Small (batch, in_features) bounds, consistent with the module's
    # per-neuron lower/upper bound tensors.
    batch, in_features = 8, 128

    k1, k2 = jax.random.split(key)
    center = jax.random.normal(k1, (batch, in_features), dtype=jnp.float32)
    radius = jnp.abs(jax.random.normal(k2, (batch, in_features), dtype=jnp.float32)) * 0.1
    lb = center - radius
    ub = center + radius

    # Host copies for verification: the pallas_call aliases (donates) the
    # input buffers, so the original device arrays are not read afterwards.
    lb_np = np.asarray(lb)
    ub_np = np.asarray(ub)

    # verbose=True reproduces the PyTorch module's full-tensor prints (cheap
    # at this size); the default prints only a shape/min/max summary.
    lb_out, ub_out = dp_print_layer(lb, ub, in_features=in_features, verbose=True)
    jax.block_until_ready((lb_out, ub_out))
    jax.effects_barrier()  # flush ordered jax.debug.print output

    assert lb_out.shape == lb_np.shape and ub_out.shape == ub_np.shape
    assert np.allclose(np.asarray(lb_out), lb_np)
    assert np.allclose(np.asarray(ub_out), ub_np)
    print("KERNEL_OK")
</pallas_src>

<mosaic_0001>
module attributes {stable_mosaic.version = 11 : i64} {
  func.func @_dp_passthrough_kernel(%arg0: memref<8x128xf32, #tpu.memory_space<any>>, %arg1: memref<8x128xf32, #tpu.memory_space<any>>, %arg2: memref<8x128xf32, #tpu.memory_space<any>>, %arg3: memref<8x128xf32, #tpu.memory_space<any>>, %arg4: memref<1xi32, #tpu.memory_space<smem>>) attributes {dimension_semantics = [], scalar_prefetch = 0 : i64, scratch_operands = 0 : i64, tpu.core_type = #tpu.core_type<tc>} {
    %c1_i32 = arith.constant 1 : i32
    %c0 = arith.constant 0 : index
    %0 = memref.load %arg4[%c0] : memref<1xi32, #tpu.memory_space<smem>>
    memref.store %c1_i32, %arg4[%c0] : memref<1xi32, #tpu.memory_space<smem>>
    return
  }
}

</mosaic_0001>

<llo_original>
// kernel: tpu_custom_call.1
$region0: #{tpu_custom_call.1}
  #allocation0 [shape = 'u32[]', space=smem, size = 0x4, offset = 0x4, fixed_abs, tag = 'smem constant byte address 0x4 - core index']
  #allocation1 [shape = 'u32[144,128]{1,0:T(1,128)}', space=vmem, size = 0x12000, scoped, tag = 'internal scratch']
  %s0 = inlined_call_operand.hbm [shape: f32[8,128], index: 0, kind: input, shape index: {}, may-alias: {0,2}]
  %s1 = inlined_call_operand.hbm [shape: f32[8,128], index: 1, kind: input, shape index: {}, may-alias: {1,3}]
  %s2 = inlined_call_operand.hbm [shape: f32[8,128], index: 2, kind: output, shape index: {0}, may-alias: {0,2}]
  %s3 = inlined_call_operand.hbm [shape: f32[8,128], index: 3, kind: output, shape index: {1}, may-alias: {1,3}]
  %s4 = inlined_call_operand.hbm [shape: s32[1], index: 4, kind: output, shape index: {2}]
  %5 = xla_tuple %s2, %s3, %s4
  %s6 = sld [smem:[#allocation0]]
  $region10: #{tpu_custom_call.1} parent=0
    _
  %s8 = ssub.s32 1, %s6
  %s9 = scalar_select 0, %s8, %s6
  $region1: #{tpu_custom_call.1} parent=0
    #allocation2 [shape = 'u8[512]{0}', space=smem, size = 0x200, scoped, tag = 'output window, operand 2, single buffered']
    #allocation3 [shape = 's32[1]{0}', space=sflag, size = 0x4, scoped, tag = 'scoped memory for tpu_custom_call.1']
    %10 = vsyncpa [#allocation3], 0
    %s11 = scalar_lea.smem [#allocation2], 0
    %12 = sst [smem:[%s11]] 1
    // Predicated region
    $region2: #{tpu_custom_call.1} parent=1 // pred_check
      _
    $region3: #{tpu_custom_call.1} parent=1 // pred_check_branch
      %14 = sbr.rel (0) target = $region5
    $region4: #{tpu_custom_call.1} parent=1 // pred_region
      %s16 = ssub.s32 16, 16
      %17 = vsyncadd [#allocation3], %s16
      %20 = dma.smem_to_hbm [#allocation2], 16, %s4, [#allocation3]
    $region5: #{tpu_custom_call.1} parent=1 // pred_fallthru
      _
    // Predicated region
    $region6: #{tpu_custom_call.1} parent=1 // pred_check
      _
    $region7: #{tpu_custom_call.1} parent=1 // pred_check_branch
      %22 = sbr.rel (0) target = $region9
    $region8: #{tpu_custom_call.1} parent=1 // pred_region
      %23 = dma.done [#allocation3], 16
    $region9: #{tpu_custom_call.1} parent=1 // pred_fallthru
      _
    %24 = sfence
    %25 = vsyncpa [#allocation3], 1

</llo_original>
